<compile_context>
chip_gen: v6e
topology: v6e:2x2x1
jax: 0.10.0
libtpu: 0.0.40
codegen_flags: <defaults>
</compile_context>

<pallas_src>
import math

import jax
import jax.numpy as jnp
from jax.experimental import pallas as pl
from jax.experimental.pallas import tpu as pltpu


def _cdiv(a: int, b: int) -> int:
    return -(-a // b)


def _drop_path_kernel(scale_ref, x_ref, o_ref):
    # scale_ref: (B,) float32 in SMEM (scalar-prefetched per-sample scales,
    #            each 0.0 or 1/keep_prob).
    # x_ref / o_ref: (1, R, 128) VMEM tile of the flattened, padded sample.
    b = pl.program_id(0)
    s = scale_ref[b].astype(o_ref.dtype)      # single SMEM scalar read + cast
    o_ref[...] = x_ref[...] * s               # broadcast multiply in x.dtype


def drop_path(x, key, drop_prob: float = 0.0, training: bool = False):
    """Pallas DropPath matching torch drop_path_f semantics."""
    if drop_prob == 0.0 or not training:
        return x

    keep_prob = 1.0 - drop_prob
    orig_shape = x.shape
    B = orig_shape[0]
    N = int(math.prod(orig_shape[1:]))

    # Per-sample uniforms (same role as torch.rand((B, 1, ..., 1))) and the
    # precomputed per-sample scale: 0.0 (dropped) or 1/keep_prob (kept).
    rand = jax.random.uniform(key, (B,), dtype=jnp.float32)
    scale = jnp.floor(keep_prob + rand) / keep_prob

    # ---- lane-dense tiling of the flattened sample --------------------------
    LANE, SUB = 128, 8
    itemsize = x.dtype.itemsize
    rows_needed = _cdiv(N, LANE)
    # ~1 MiB per VMEM buffer, rounded to a multiple of 8 sublanes.
    target_rows = max(SUB, ((1 << 20) // (itemsize * LANE)) // SUB * SUB)
    num_chunks = max(1, _cdiv(rows_needed, target_rows))
    R = _cdiv(rows_needed, num_chunks * SUB) * SUB     # rows per chunk (mult of 8)
    rows_total = num_chunks * R
    N_pad = rows_total * LANE

    x2 = x.reshape(B, N)
    if N_pad != N:
        x2 = jnp.pad(x2, ((0, 0), (0, N_pad - N)))     # guard the tail chunk
    x3 = x2.reshape(B, rows_total, LANE)

    out = pl.pallas_call(
        _drop_path_kernel,
        out_shape=jax.ShapeDtypeStruct((B, rows_total, LANE), x.dtype),
        grid_spec=pltpu.PrefetchScalarGridSpec(
            num_scalar_prefetch=1,                     # scale -> SMEM
            grid=(B, num_chunks),
            in_specs=[
                pl.BlockSpec((1, R, LANE), lambda b, c, scale: (b, c, 0)),
            ],
            out_specs=pl.BlockSpec((1, R, LANE), lambda b, c, scale: (b, c, 0)),
        ),
        compiler_params=pltpu.CompilerParams(
            dimension_semantics=("parallel", "parallel"),
        ),
        cost_estimate=pl.CostEstimate(
            flops=B * N_pad,
            transcendentals=0,
            bytes_accessed=2 * B * N_pad * itemsize,
        ),
    )(scale, x3)

    out = out.reshape(B, N_pad)
    if N_pad != N:
        out = out[:, :N]
    return out.reshape(orig_shape)


if __name__ == "__main__":
    key = jax.random.PRNGKey(0)
    kx, kdrop, kx2 = jax.random.split(key, 3)

    drop_prob = 0.3
    keep_prob = 1.0 - drop_prob

    # --- Case 1: Swin-style token tensor, N = L*C is a multiple of 128 -------
    B, L, C = 2, 64, 32
    x = jax.random.normal(kx, (B, L, C), dtype=jnp.float32)

    out_train = drop_path(x, kdrop, drop_prob=drop_prob, training=True)
    out_train = jax.block_until_ready(out_train)

    # Reference: recompute mask in plain JAX with the same randoms.
    rand = jax.random.uniform(kdrop, (B,), dtype=jnp.float32)
    scale_ref = (jnp.floor(keep_prob + rand) / keep_prob).reshape(B, 1, 1)
    ref = x * scale_ref
    assert jnp.allclose(out_train, ref, atol=1e-6), "mismatch vs reference"

    # Eval path: identity (matches torch when training=False).
    out_eval = drop_path(x, kdrop, drop_prob=drop_prob, training=False)
    out_eval = jax.block_until_ready(out_eval)
    assert jnp.array_equal(out_eval, x)

    # --- Case 2: ragged tail (N not a multiple of 128) exercises padding -----
    B2, L2, C2 = 2, 7, 20
    x_tail = jax.random.normal(kx2, (B2, L2, C2), dtype=jnp.float32)
    out_tail = drop_path(x_tail, kdrop, drop_prob=drop_prob, training=True)
    out_tail = jax.block_until_ready(out_tail)

    rand2 = jax.random.uniform(kdrop, (B2,), dtype=jnp.float32)
    scale_ref2 = (jnp.floor(keep_prob + rand2) / keep_prob).reshape(B2, 1, 1)
    ref_tail = x_tail * scale_ref2
    assert jnp.allclose(out_tail, ref_tail, atol=1e-6), "tail mismatch vs reference"
    assert out_tail.shape == x_tail.shape

    print("KERNEL_OK")
</pallas_src>

<mosaic_0001>
module attributes {stable_mosaic.version = 11 : i64} {
  func.func @_drop_path_kernel(%arg0: i32, %arg1: i32, %arg2: memref<2xf32, #tpu.memory_space<smem>>, %arg3: memref<1x16x128xf32, #tpu.memory_space<vmem>>, %arg4: memref<1x16x128xf32, #tpu.memory_space<vmem>>) attributes {dimension_semantics = [#tpu.dimension_semantics<parallel>, #tpu.dimension_semantics<parallel>], iteration_bounds = array<i64: 2, 1>, scalar_prefetch = 1 : i64, scratch_operands = 0 : i64, tpu.core_type = #tpu.core_type<tc>, window_params = [{transform_indices = @transform_0, window_bounds = array<i64: 1, 16, 128>}, {transform_indices = @transform_1, window_bounds = array<i64: 1, 16, 128>}]} {
    %0 = arith.index_cast %arg0 : i32 to index
    %1 = memref.load %arg2[%0] : memref<2xf32, #tpu.memory_space<smem>>
    %c0 = arith.constant 0 : index
    %c0_0 = arith.constant 0 : index
    %c0_1 = arith.constant 0 : index
    %2 = vector.load %arg3[%c0, %c0_0, %c0_1] : memref<1x16x128xf32, #tpu.memory_space<vmem>>, vector<1x16x128xf32>
    %3 = vector.broadcast %1 : f32 to vector<1x16x128xf32>
    %4 = arith.mulf %2, %3 : vector<1x16x128xf32>
    %c0_2 = arith.constant 0 : index
    %c0_3 = arith.constant 0 : index
    %c0_4 = arith.constant 0 : index
    %5 = vector.load %arg4[%c0_2, %c0_3, %c0_4] : memref<1x16x128xf32, #tpu.memory_space<vmem>>, vector<1x16x128xf32>
    tpu.vector_store %arg4[%c0_2, %c0_3, %c0_4], %4 {strides = array<i32>} : memref<1x16x128xf32, #tpu.memory_space<vmem>>, vector<1x16x128xf32>,
    return
  }
  func.func @transform_0(%arg0: i32, %arg1: i32, %arg2: memref<2xf32, #tpu.memory_space<smem>>) -> (i32, i32, i32) {
    %c0_i32 = arith.constant 0 : i32
    %c0_i32_0 = arith.constant 0 : i32
    return %arg0, %arg1, %c0_i32 : i32, i32, i32
  }
  func.func @transform_1(%arg0: i32, %arg1: i32, %arg2: memref<2xf32, #tpu.memory_space<smem>>) -> (i32, i32, i32) {
    %c0_i32 = arith.constant 0 : i32
    %c0_i32_0 = arith.constant 0 : i32
    return %arg0, %arg1, %c0_i32 : i32, i32, i32
  }
}

</mosaic_0001>

<llo_original>
// kernel: tpu_custom_call.1
$region0: #{tpu_custom_call.1}
  #allocation0 [shape = 'u32[]', space=smem, size = 0x4, offset = 0x4, fixed_abs, tag = 'smem constant byte address 0x4 - core index']
  #allocation1 [shape = 'u32[144,128]{1,0:T(1,128)}', space=vmem, size = 0x12000, scoped, tag = 'internal scratch']
  #allocation2 [shape = 's32[1]{0}', space=sflag, size = 0x4, scoped, tag = 'scoped memory for tpu_custom_call.1']
  #allocation3 [shape = 'u8[512]{0}', space=smem, size = 0x200, scoped, tag = 'prefetched SMEM operand 0']
  %s0 = inlined_call_operand.hbm [shape: f32[2], index: 0, kind: input, shape index: {}]
  %s1 = inlined_call_operand.hbm [shape: f32[2,16,128], index: 1, kind: input, shape index: {}]
  %s2 = inlined_call_operand.hbm [shape: f32[2,16,128], index: 2, kind: output, shape index: {}]
  %s3 = sld [smem:[#allocation0]]
  $region41: #{tpu_custom_call.1} parent=0
    _
  %s5 = ssub.s32 1, %s3
  %s6 = scalar_select 0, %s5, %s3
  %8 = dma.hbm_to_smem %s0, 16, [#allocation3], [#allocation2]
  %9 = dma.done [#allocation2], 16
  %10 = sfence
  $region1: #{tpu_custom_call.1} parent=0
    #allocation4 [shape = 'u8[16384]{0}', space=vmem, size = 0x4000, scoped, tag = 'input window, operand 1']
    #allocation5 [shape = 's32[2]{0}', space=sflag, size = 0x8, scoped, tag = 'scoped memory for tpu_custom_call.1']
    #allocation6 [shape = 's32[2]{0}', space=sflag, size = 0x8, scoped, tag = 'scoped memory for tpu_custom_call.1']
    #allocation7 [shape = 'u8[16384]{0}', space=vmem, size = 0x4000, scoped, tag = 'output window, operand 0']
    %11 = vsyncpa [#allocation5], 0
    %s12 = scalar_lea.sflag [#allocation5], 1
    %13 = vsyncpa %s12, 0
    %14 = vsyncpa [#allocation6], 0
    %s15 = scalar_lea.sflag [#allocation6], 1
    %16 = vsyncpa %s15, 0
    loop: start=0, step=1, limit=4
    $region2: #{tpu_custom_call.1} parent=1 // loop_pre_header
      _
    $region3: #{tpu_custom_call.1} parent=1 // loop_header
      %s18 = sphi 0, %s22
      %p19 = scmp.ge.s32.totalorder %s18, 4
      %s25 = sphi 0, %s37
      %s26 = sphi 0, %s33
      %s27 = sphi 0, %s25
      %s28 = sphi 0, %s26
      %s29 = sphi 0, %s27
      %s30 = sphi 0, %s28
      %s42 = sphi 0, %s44
      %s45 = sphi 0, %s42
      %s46 = sphi 0, %s45
      %s62 = sphi 0, %s46
      %s70 = sphi 0, %s72
      %s73 = sphi 0, %s70
      %s74 = sphi 0, %s73
      %s90 = sphi 0, %s74
    $region4: #{tpu_custom_call.1} parent=1 // loop_header_branch
      %21 = sbr.rel (%p19) target = $region8
    $region5: #{tpu_custom_call.1} parent=1 // loop_body
      %s23 = ssub.s32 %s18, 1
      %s24 = ssub.s32 %s18, 2
      %s31 = sadd.s32 1, %s26
      %p32 = scmp.ge.s32.totalorder %s31, 1
      %s33 = scalar_select %p32, 0, %s31
      %s34 = sadd.s32 1, %s25
      %s35 = scalar_select %p32, %s34, %s25
      %p36 = scmp.ge.s32.totalorder %s35, 2
      %s37 = scalar_select %p36, 0, %s35
      %s38 = ssub.s32 %s25, %s37
      %s39 = ssub.s32 %s26, %s33
      %s40 = sor.u32 %s38, %s39
      %p41 = scmp.eq.s32.totalorder %s40, 0
      %s43 = sadd.s32 %s42, 1
      %s44 = scalar_select %p41, %s42, %s43
      %p47 = pneg %p41
      %p48 = scmp.eq.s32.totalorder %s18, 1
      %p49 = por %p47, %p48
      %p50 = scmp.ne.s32.totalorder %s42, %s45
      %p51 = scmp.eq.s32.totalorder %s18, 0
      %p52 = por %p50, %p51
      %p53 = scmp.ne.s32.totalorder %s42, %s45
      %p54 = scmp.eq.s32.totalorder %s23, 1
      %p55 = por %p53, %p54
      %p56 = scmp.ne.s32.totalorder %s45, %s46
      %p57 = scmp.eq.s32.totalorder %s23, 0
      %p58 = por %p56, %p57
      %p59 = scmp.ne.s32.totalorder %s45, %s46
      %p60 = scmp.eq.s32.totalorder %s24, 1
      %p61 = por %p59, %p60
      %p63 = scmp.ne.s32.totalorder %s46, %s62
      %p64 = scmp.eq.s32.totalorder %s24, 0
      %p65 = por %p63, %p64
      %s66 = ssub.s32 %s25, %s37
      %s67 = ssub.s32 %s26, %s33
      %s68 = sor.u32 %s66, %s67
      %p69 = scmp.eq.s32.totalorder %s68, 0
      %s71 = sadd.s32 %s70, 1
      %s72 = scalar_select %p69, %s70, %s71
      %p75 = pneg %p69
      %p76 = scmp.eq.s32.totalorder %s18, 1
      %p77 = por %p75, %p76
      %p78 = scmp.ne.s32.totalorder %s70, %s73
      %p79 = scmp.eq.s32.totalorder %s18, 0
      %p80 = por %p78, %p79
      %p81 = scmp.ne.s32.totalorder %s70, %s73
      %p82 = scmp.eq.s32.totalorder %s23, 1
      %p83 = por %p81, %p82
      %p84 = scmp.ne.s32.totalorder %s73, %s74
      %p85 = scmp.eq.s32.totalorder %s23, 0
      %p86 = por %p84, %p85
      %p87 = scmp.ne.s32.totalorder %s73, %s74
      %p88 = scmp.eq.s32.totalorder %s24, 1
      %p89 = por %p87, %p88
      %p91 = scmp.ne.s32.totalorder %s74, %s90
      %p92 = scmp.eq.s32.totalorder %s24, 0
      %p93 = por %p91, %p92
      %p94 = scmp.le.s32.totalorder 1, %s18
      %p95 = scmp.lt.s32.totalorder %s18, 3
      %p96 = pnand %p94, %p95
      %p97 = pneg %p96
      // Predicated region
      $region9: #{tpu_custom_call.1} parent=5 // pred_check
        _
      $region10: #{tpu_custom_call.1} parent=5 // pred_check_branch
        %99 = sbr.rel (%p96) target = $region12
      $region11: #{tpu_custom_call.1} parent=5 // pred_region
        %s100 = ssub.s32 %s18, 1
      $region12: #{tpu_custom_call.1} parent=5 // pred_fallthru
        _
      %p101 = scmp.lt.s32.totalorder %s18, 2
      // Predicated region
      $region13: #{tpu_custom_call.1} parent=5 // pred_check
        %p102 = pneg %p101
      $region14: #{tpu_custom_call.1} parent=5 // pred_check_branch
        %104 = sbr.rel (%p102) target = $region16
      $region15: #{tpu_custom_call.1} parent=5 // pred_region
        // Predicated region
        $region17: #{tpu_custom_call.1} parent=15 // pred_check
          %p105 = pneg %p52
        $region18: #{tpu_custom_call.1} parent=15 // pred_check_branch
          %107 = sbr.rel (%p105) target = $region20
        $region19: #{tpu_custom_call.1} parent=15 // pred_region
          %s108 = sand.u32 %s42, 1
          %s109 = scalar_lea.sflag [#allocation5], %s108
          %s110 = sand.u32 %s42, 1
          %s111 = smul.addr %s110, 16
          %s112 = scalar_lea.vmem [#allocation4], %s111
          %s113 = smul.u32 2, %s26
          %s115 = ssub.s32 256, 256
          %116 = vsyncadd %s109, %s115
          %s117 = smul.addr %s25, 2
          %s118 = sadd.s32 %s113, %s117
          %s119 = smul.addr %s118, 128
          %s120 = scalar_lea.hbm %s1, %s119
          %s121 = sshll.u32 %s112, 4
          %s122 = int_to_ptr.vmem [resolvable:$true] %s121
          %127 = dma.hbm_to_vmem [thread:$0]  %s120, 256, %s122, %s109, 128, 128, 8
        $region20: #{tpu_custom_call.1} parent=15 // pred_fallthru
          _
      $region16: #{tpu_custom_call.1} parent=5 // pred_fallthru
        _
      %p128 = scmp.le.s32.totalorder 1, %s18
      %p129 = scmp.lt.s32.totalorder %s18, 3
      %p130 = pnand %p128, %p129
      %p131 = pneg %p130
      // Predicated region
      $region21: #{tpu_custom_call.1} parent=5 // pred_check
        _
      $region22: #{tpu_custom_call.1} parent=5 // pred_check_branch
        %133 = sbr.rel (%p130) target = $region24
      $region23: #{tpu_custom_call.1} parent=5 // pred_region
        %s134 = ssub.s32 %s18, 1
        %s135 = sand.u32 %s45, 1
        %s136 = scalar_lea.sflag [#allocation5], %s135
        %s137 = sand.u32 %s45, 1
        %s138 = smul.addr %s137, 16
        %s139 = scalar_lea.vmem [#allocation4], %s138
        // Predicated region
        $region25: #{tpu_custom_call.1} parent=23 // pred_check
          %p140 = pneg %p58
        $region26: #{tpu_custom_call.1} parent=23 // pred_check_branch
          %142 = sbr.rel (%p140) target = $region28
        $region27: #{tpu_custom_call.1} parent=23 // pred_region
          %143 = dma.done %s136, 256
        $region28: #{tpu_custom_call.1} parent=23 // pred_fallthru
          _
        %s144 = sand.u32 %s45, 1
        %s145 = scalar_lea.sflag [#allocation5], %s144
        %s146 = sand.u32 %s45, 1
        %s147 = smul.addr %s146, 16
        %s148 = scalar_lea.vmem [#allocation4], %s147
        %p149 = pneg %p58
        %p150 = pneg %p55
        %p151 = pneg %p86
        %p152 = pneg %p83
        %s153 = sand.u32 %s73, 1
        %s154 = scalar_lea.sflag [#allocation6], %s153
        %s155 = sand.u32 %s73, 1
        %s156 = smul.addr %s155, 16
        %s157 = scalar_lea.vmem [#allocation7], %s156
        %s158 = smul.u32 2, %s28
        %s159 = smul.u32 2, %s28
        %s160 = sld [smem:[#allocation3 + %s27]]
        %v161 = vld [vmem:[%s139] sm:$0xff]
        %v162 = vld [vmem:[%s139 + $0x8] sm:$0xff]
        %v163 = vstv %s160
        %v164 = vmul.f32 %v161, %v163
        %v165 = vmul.f32 %v162, %v163
        %166 = vst [vmem:[%s157] sm:$0xff] %v164
        %167 = vst [vmem:[%s157 + $0x8] sm:$0xff] %v165
        %s168 = sand.u32 %s73, 1
        %s169 = scalar_lea.sflag [#allocation6], %s168
        %s170 = sand.u32 %s73, 1
        %s171 = smul.addr %s170, 16
        %s172 = scalar_lea.vmem [#allocation7], %s171
        // Predicated region
        $region29: #{tpu_custom_call.1} parent=23 // pred_check
          %p173 = pneg %p83
        $region30: #{tpu_custom_call.1} parent=23 // pred_check_branch
          %175 = sbr.rel (%p173) target = $region32
        $region31: #{tpu_custom_call.1} parent=23 // pred_region
          %s176 = smul.u32 2, %s28
          %s178 = ssub.s32 256, 256
          %179 = vsyncadd %s169, %s178
          %s180 = smul.addr %s27, 2
          %s181 = sadd.s32 %s176, %s180
          %s182 = smul.addr %s181, 128
          %s183 = scalar_lea.hbm %s2, %s182
          %s184 = sshll.u32 %s172, 4
          %s185 = int_to_ptr.vmem [resolvable:$true] %s184
          %190 = dma.vmem_to_hbm [thread:$0]  %s185, 256, %s183, %s169, 128, 128, 8
        $region32: #{tpu_custom_call.1} parent=23 // pred_fallthru
          _
      $region24: #{tpu_custom_call.1} parent=5 // pred_fallthru
        _
      %p191 = scmp.le.s32.totalorder 2, %s18
      // Predicated region
      $region33: #{tpu_custom_call.1} parent=5 // pred_check
        %p192 = pneg %p191
      $region34: #{tpu_custom_call.1} parent=5 // pred_check_branch
        %194 = sbr.rel (%p192) target = $region36
      $region35: #{tpu_custom_call.1} parent=5 // pred_region
        %s195 = ssub.s32 %s18, 2
        // Predicated region
        $region37: #{tpu_custom_call.1} parent=35 // pred_check
          %p196 = pneg %p89
        $region38: #{tpu_custom_call.1} parent=35 // pred_check_branch
          %198 = sbr.rel (%p196) target = $region40
        $region39: #{tpu_custom_call.1} parent=35 // pred_region
          %s199 = sand.u32 %s74, 1
          %s200 = scalar_lea.sflag [#allocation6], %s199
          %s201 = sand.u32 %s74, 1
          %s202 = smul.addr %s201, 16
          %s203 = scalar_lea.vmem [#allocation7], %s202
          %204 = dma.done %s200, 256
        $region40: #{tpu_custom_call.1} parent=35 // pred_fallthru
          _
      $region36: #{tpu_custom_call.1} parent=5 // pred_fallthru
        _
    $region6: #{tpu_custom_call.1} parent=1 // loop_footer
      %s22 = sadd.s32 1, %s18
    $region7: #{tpu_custom_call.1} parent=1 // loop_footer_branch
      %17 = sbr.rel target = $region3
    $region8: #{tpu_custom_call.1} parent=1 // loop_exit
      _
    %205 = vsyncpa [#allocation5], 1
    %s206 = scalar_lea.sflag [#allocation5], 1
    %207 = vsyncpa %s206, 1
    %208 = vsyncpa [#allocation6], 1
    %s209 = scalar_lea.sflag [#allocation6], 1
    %210 = vsyncpa %s209, 1

</llo_original>
